<compile_context>
chip_gen: v7x
topology: tpu7x:2x2x1
jax: 0.10.0
libtpu: 0.0.40
codegen_flags: <defaults>
</compile_context>

<pallas_src>
import math

import numpy as np
import jax
import jax.numpy as jnp
from jax.experimental import pallas as pl
from jax.experimental.pallas import tpu as pltpu


def _gauss_taps(sigma, kernel_size):
    """Normalized 1D Gaussian taps, identical to Gaussian.__init__."""
    mu = kernel_size // 2
    g = [math.exp(-((i - mu) ** 2) / float(2 * sigma ** 2)) for i in range(kernel_size)]
    s = float(sum(g))
    return [v / s for v in g]


def _banded_blur_matrix(n, taps):
    """(n, n) matrix M with M[r, c] = taps[c - r + pad].

    M @ x is the 1D 'same'-size blur of x with zero padding: taps that would
    reach outside [0, n) are simply dropped, which is exactly Conv2d padding."""
    k = len(taps)
    pad = k // 2
    m = np.zeros((n, n), np.float32)
    for r in range(n):
        for kk in range(k):
            c = r + kk - pad
            if 0 <= c < n:
                m[r, c] = taps[kk]
    return m


def _block_diag(m, reps):
    n = m.shape[0]
    out = np.zeros((reps * n, reps * n), m.dtype)
    for r in range(reps):
        out[r * n:(r + 1) * n, r * n:(r + 1) * n] = m
    return out


def _gauss_sep_packed_kernel(a_v_ref, a_h_t_ref, x_ref, o_ref):
    # a_v_ref:   (gt*H, gt*H) bf16  blockdiag(A_v)    -- vertical blur, left multiply
    # a_h_t_ref: (lp*W, lp*W) bf16  blockdiag(A_h^T)  -- horizontal blur, right multiply
    # x_ref:     (gt*H, lp*W) bf16  lane-dense packed input planes
    # o_ref:     (gt*H, lp*W) f32   lane-dense packed blurred planes
    x = x_ref[...]
    t = jnp.dot(x, a_h_t_ref[...],
                preferred_element_type=jnp.float32)            # horizontal pass (MXU)
    y = jnp.dot(a_v_ref[...], t.astype(jnp.bfloat16),
                preferred_element_type=jnp.float32)            # vertical pass (MXU)
    o_ref[...] = y.astype(o_ref.dtype)


def gen_den_map_forward(dot_map, sigma=4.0, kernel_size=15):
    """dot_map: (N, C, H, W). Returns the Gaussian-blurred density map, same shape."""
    N, C, H, W = dot_map.shape
    B = N * C
    orig_dtype = dot_map.dtype

    taps = _gauss_taps(sigma, kernel_size)
    a_v = _banded_blur_matrix(H, taps)           # (H, H)
    a_h_t = _banded_blur_matrix(W, taps).T.copy()  # (W, W)

    # Lane-pack factor: lp planes side by side so lp*W is a multiple of 128.
    if W < 128 and 128 % W == 0:
        lp = 128 // W
    else:
        lp = 1

    x = dot_map.reshape(B, H, W).astype(jnp.bfloat16)
    Bp = -(-B // lp) * lp
    if Bp != B:
        # Only when lp does not divide B: a few zero planes on the leading axis.
        # (Alternative: keep B and mask the ragged tile with pl.when.)
        x = jnp.pad(x, ((0, Bp - B), (0, 0), (0, 0)))
    G = Bp // lp                                  # number of lane-packed groups

    # Groups per grid step: keep >= 2 grid steps when possible (v7x has 2 TCs
    # and "parallel" can only split a grid with >= 2 steps) and bound tile rows.
    max_rows = 512
    gt = max(1, min(max_rows // max(H, 1), G // 2 if G >= 2 else 1))
    while G % gt != 0:
        gt -= 1
    if (gt * H) % 8 != 0:
        # (8,128) BlockSpec constraint: fall back to one full-array block.
        gt = G

    rows, cols = gt * H, lp * W

    # Host-side lane-dense packing (layout plumbing only):
    # (G, lp, H, W) -> (G, H, lp, W) -> (G*H, lp*W)
    xp = x.reshape(G, lp, H, W).transpose(0, 2, 1, 3).reshape(G * H, lp * W)

    a_v_bd = jnp.asarray(_block_diag(a_v, gt), dtype=jnp.bfloat16)      # (rows, rows)
    a_h_bd_t = jnp.asarray(_block_diag(a_h_t, lp), dtype=jnp.bfloat16)  # (cols, cols)

    # Explicit VMEM budget: double-buffered in/out tiles + the two constant matrices.
    vmem_needed = (2 * (rows * cols * 2 + rows * cols * 4)
                   + 2 * (rows * rows * 2 + cols * cols * 2))
    vmem_limit = int(min(max(2 * vmem_needed, 8 << 20), 32 << 20))

    out = pl.pallas_call(
        _gauss_sep_packed_kernel,
        out_shape=jax.ShapeDtypeStruct((G * H, cols), jnp.float32),
        grid=(G // gt,),
        in_specs=[
            pl.BlockSpec((rows, rows), lambda i: (0, 0)),   # blockdiag(A_v): same block every step
            pl.BlockSpec((cols, cols), lambda i: (0, 0)),   # blockdiag(A_h^T): same block every step
            pl.BlockSpec((rows, cols), lambda i: (i, 0)),   # packed input slab
        ],
        out_specs=pl.BlockSpec((rows, cols), lambda i: (i, 0)),
        compiler_params=pltpu.CompilerParams(
            dimension_semantics=("parallel",),
            vmem_limit_bytes=vmem_limit,
        ),
    )(a_v_bd, a_h_bd_t, xp)

    # Unpack: (G*H, lp*W) -> (G, H, lp, W) -> (G, lp, H, W) -> (Bp, H, W)
    y = out.reshape(G, H, lp, W).transpose(0, 2, 1, 3).reshape(Bp, H, W)
    return y[:B].reshape(N, C, H, W).astype(orig_dtype)


if __name__ == "__main__":
    SIGMA, KSIZE = 4.0, 15
    key = jax.random.PRNGKey(0)
    # Gaussianlayer is built with in_channels=1 -> dot maps are (N, 1, H, W).
    # N=16 planes of 16x16: lane-packs into (16, 128) slabs, grid=(2,) steps.
    x = jax.random.uniform(key, (16, 1, 16, 16), dtype=jnp.float32)

    out = gen_den_map_forward(x, sigma=SIGMA, kernel_size=KSIZE)
    out = jax.block_until_ready(out)
    assert out.shape == x.shape

    # Exact float64 reference of the Conv2d (padding=7, bias=False) the module runs.
    pad = KSIZE // 2
    taps = np.asarray(_gauss_taps(SIGMA, KSIZE), np.float64)
    w2d = np.outer(taps, taps)
    xn = np.asarray(x, np.float64)
    xpad = np.pad(xn, ((0, 0), (0, 0), (pad, pad), (pad, pad)))
    ref = np.zeros_like(xn)
    H, W = xn.shape[-2:]
    for ki in range(KSIZE):
        for kj in range(KSIZE):
            ref += w2d[ki, kj] * xpad[:, :, ki:ki + H, kj:kj + W]

    err = float(np.max(np.abs(np.asarray(out, np.float64) - ref)))
    # bf16 MXU operands with f32 accumulation: worst-case rounding is a few e-3;
    # an algorithmic error (wrong taps / offsets / packing) would be >> 0.05.
    assert err < 2e-2, f"max abs err {err}"
    print("KERNEL_OK")
</pallas_src>

<mosaic_0001>
module attributes {stable_mosaic.version = 11 : i64} {
  func.func @_gauss_sep_packed_kernel(%arg0: i32, %arg1: memref<16x16xbf16, #tpu.memory_space<vmem>>, %arg2: memref<128x128xbf16, #tpu.memory_space<vmem>>, %arg3: memref<16x128xbf16, #tpu.memory_space<vmem>>, %arg4: memref<16x128xf32, #tpu.memory_space<vmem>>) attributes {dimension_semantics = [#tpu.dimension_semantics<parallel>], iteration_bounds = array<i64: 2>, scalar_prefetch = 0 : i64, scratch_operands = 0 : i64, tpu.core_type = #tpu.core_type<tc>, window_params = [{pipeline_mode = #tpu.pipeline_mode<synchronous>, transform_indices = @transform_0, window_bounds = array<i64: 16, 16>}, {pipeline_mode = #tpu.pipeline_mode<synchronous>, transform_indices = @transform_1, window_bounds = array<i64: 128, 128>}, {transform_indices = @transform_2, window_bounds = array<i64: 16, 128>}, {transform_indices = @transform_3, window_bounds = array<i64: 16, 128>}]} {
    %c0 = arith.constant 0 : index
    %c0_0 = arith.constant 0 : index
    %0 = vector.load %arg3[%c0, %c0_0] : memref<16x128xbf16, #tpu.memory_space<vmem>>, vector<16x128xbf16>
    %c0_1 = arith.constant 0 : index
    %c0_2 = arith.constant 0 : index
    %1 = vector.load %arg2[%c0_1, %c0_2] : memref<128x128xbf16, #tpu.memory_space<vmem>>, vector<128x128xbf16>
    %cst = arith.constant dense<0.000000e+00> : vector<16x128xf32>
    %2 = tpu.matmul %0, %1, %cst {dimension_numbers = #tpu.dot_dimension_numbers<[1], [0], [0], [1], [0, 0, 1, 1], [], []>} : vector<16x128xbf16>, vector<128x128xbf16>, vector<16x128xf32> -> vector<16x128xf32>
    %c0_3 = arith.constant 0 : index
    %c0_4 = arith.constant 0 : index
    %3 = vector.load %arg1[%c0_3, %c0_4] : memref<16x16xbf16, #tpu.memory_space<vmem>>, vector<16x16xbf16>
    %4 = arith.truncf %2 : vector<16x128xf32> to vector<16x128xbf16>
    %cst_5 = arith.constant dense<0.000000e+00> : vector<16x128xf32>
    %5 = tpu.matmul %3, %4, %cst_5 {dimension_numbers = #tpu.dot_dimension_numbers<[1], [0], [0], [1], [0, 0, 1, 1], [], []>} : vector<16x16xbf16>, vector<16x128xbf16>, vector<16x128xf32> -> vector<16x128xf32>
    %c0_6 = arith.constant 0 : index
    %c0_7 = arith.constant 0 : index
    %6 = vector.load %arg4[%c0_6, %c0_7] : memref<16x128xf32, #tpu.memory_space<vmem>>, vector<16x128xf32>
    tpu.vector_store %arg4[%c0_6, %c0_7], %5 {strides = array<i32>} : memref<16x128xf32, #tpu.memory_space<vmem>>, vector<16x128xf32>,
    return
  }
  func.func @transform_0(%arg0: i32) -> (i32, i32) {
    %c0_i32 = arith.constant 0 : i32
    %c0_i32_0 = arith.constant 0 : i32
    %c0_i32_1 = arith.constant 0 : i32
    return %c0_i32, %c0_i32_0 : i32, i32
  }
  func.func @transform_1(%arg0: i32) -> (i32, i32) {
    %c0_i32 = arith.constant 0 : i32
    %c0_i32_0 = arith.constant 0 : i32
    %c0_i32_1 = arith.constant 0 : i32
    return %c0_i32, %c0_i32_0 : i32, i32
  }
  func.func @transform_2(%arg0: i32) -> (i32, i32) {
    %c0_i32 = arith.constant 0 : i32
    %c0_i32_0 = arith.constant 0 : i32
    return %arg0, %c0_i32 : i32, i32
  }
  func.func @transform_3(%arg0: i32) -> (i32, i32) {
    %c0_i32 = arith.constant 0 : i32
    %c0_i32_0 = arith.constant 0 : i32
    return %arg0, %c0_i32 : i32, i32
  }
}

</mosaic_0001>

<llo_original>
// kernel: tpu_custom_call.1
$region0: #{tpu_custom_call.1}
  #allocation0 [shape = 'u32[]', space=smem, size = 0x4, offset = 0x4, fixed_abs, tag = 'smem constant byte address 0x4 - core index']
  #allocation1 [shape = 'u32[144,128]{1,0:T(1,128)}', space=vmem, size = 0x12000, scoped, tag = 'internal scratch']
  %s0 = inlined_call_operand.hbm [shape: bf16[16,16], index: 0, kind: input, shape index: {}]
  %s1 = inlined_call_operand.hbm [shape: bf16[128,128], index: 1, kind: input, shape index: {}]
  %s2 = inlined_call_operand.hbm [shape: bf16[32,128], index: 2, kind: input, shape index: {}]
  %s3 = inlined_call_operand.hbm [shape: f32[32,128], index: 3, kind: output, shape index: {}]
  %s4 = sld [smem:[#allocation0]]
  $region57: #{tpu_custom_call.1} parent=0
    _
  %s6 = ssub.s32 1, %s4
  %s7 = scalar_select 0, %s6, %s4
  $region1: #{tpu_custom_call.1} parent=0
    #allocation2 [shape = 'u8[4096]{0}', space=vmem, size = 0x1000, scoped, tag = 'input window, operand 0, single buffered']
    #allocation3 [shape = 's32[2]{0}', space=sflag, size = 0x8, scoped, tag = 'scoped memory for tpu_custom_call.1']
    #allocation4 [shape = 's32[2]{0}', space=sflag, size = 0x8, scoped, tag = 'scoped memory for tpu_custom_call.1']
    #allocation5 [shape = 'u8[32768]{0}', space=vmem, size = 0x8000, scoped, tag = 'input window, operand 1, single buffered']
    #allocation6 [shape = 's32[1]{0}', space=sflag, size = 0x4, scoped, tag = 'scoped memory for tpu_custom_call.1']
    #allocation7 [shape = 'u8[8192]{0}', space=vmem, size = 0x2000, scoped, tag = 'input window, operand 2']
    #allocation8 [shape = 'u8[16384]{0}', space=vmem, size = 0x4000, scoped, tag = 'output window, operand 0']
    %8 = vsyncpa [#allocation3], 0
    %9 = vsyncpa [#allocation6], 0
    %10 = vsyncpa [#allocation4], 0
    %s11 = scalar_lea.sflag [#allocation4], 1
    %12 = vsyncpa %s11, 0
    loop: start=0, step=1, limit=4
    $region2: #{tpu_custom_call.1} parent=1 // loop_pre_header
      _
    $region3: #{tpu_custom_call.1} parent=1 // loop_header
      %s14 = sphi 0, %s18
      %p15 = scmp.ge.s32.totalorder %s14, 4
      %s22 = sphi 0, %s22
      %s24 = sphi 0, %s22
      %s25 = sphi 0, %s24
      %s39 = sphi 0, %s25
      %s43 = sphi 0, %s43
      %s45 = sphi 0, %s43
      %s46 = sphi 0, %s45
      %s60 = sphi 0, %s46
      %s66 = sphi 0, %s68
      %s69 = sphi 0, %s66
      %s70 = sphi 0, %s69
      %s86 = sphi 0, %s70
      %s92 = sphi 0, %s94
      %s95 = sphi 0, %s92
      %s96 = sphi 0, %s95
      %s112 = sphi 0, %s96
    $region4: #{tpu_custom_call.1} parent=1 // loop_header_branch
      %17 = sbr.rel (%p15) target = $region8
    $region5: #{tpu_custom_call.1} parent=1 // loop_body
      %s19 = ssub.s32 %s14, 1
      %s20 = ssub.s32 %s14, 2
      %s21 = sadd.s32 %s14, 1
      %s23 = sadd.s32 %s22, 1
      %p26 = scmp.eq.s32.totalorder %s14, 1
      %p27 = scmp.ne.s32.totalorder %s22, %s24
      %p28 = scmp.eq.s32.totalorder %s14, 0
      %p29 = por %p27, %p28
      %p30 = scmp.ne.s32.totalorder %s22, %s24
      %p31 = scmp.eq.s32.totalorder %s19, 1
      %p32 = por %p30, %p31
      %p33 = scmp.ne.s32.totalorder %s24, %s25
      %p34 = scmp.eq.s32.totalorder %s19, 0
      %p35 = por %p33, %p34
      %p36 = scmp.ne.s32.totalorder %s24, %s25
      %p37 = scmp.eq.s32.totalorder %s20, 1
      %p38 = por %p36, %p37
      %p40 = scmp.ne.s32.totalorder %s25, %s39
      %p41 = scmp.eq.s32.totalorder %s20, 0
      %p42 = por %p40, %p41
      %s44 = sadd.s32 %s43, 1
      %p47 = scmp.eq.s32.totalorder %s14, 1
      %p48 = scmp.ne.s32.totalorder %s43, %s45
      %p49 = scmp.eq.s32.totalorder %s14, 0
      %p50 = por %p48, %p49
      %p51 = scmp.ne.s32.totalorder %s43, %s45
      %p52 = scmp.eq.s32.totalorder %s19, 1
      %p53 = por %p51, %p52
      %p54 = scmp.ne.s32.totalorder %s45, %s46
      %p55 = scmp.eq.s32.totalorder %s19, 0
      %p56 = por %p54, %p55
      %p57 = scmp.ne.s32.totalorder %s45, %s46
      %p58 = scmp.eq.s32.totalorder %s20, 1
      %p59 = por %p57, %p58
      %p61 = scmp.ne.s32.totalorder %s46, %s60
      %p62 = scmp.eq.s32.totalorder %s20, 0
      %p63 = por %p61, %p62
      %s64 = ssub.s32 %s14, %s21
      %p65 = scmp.eq.s32.totalorder %s64, 0
      %s67 = sadd.s32 %s66, 1
      %s68 = scalar_select %p65, %s66, %s67
      %p71 = pneg %p65
      %p72 = scmp.eq.s32.totalorder %s14, 1
      %p73 = por %p71, %p72
      %p74 = scmp.ne.s32.totalorder %s66, %s69
      %p75 = scmp.eq.s32.totalorder %s14, 0
      %p76 = por %p74, %p75
      %p77 = scmp.ne.s32.totalorder %s66, %s69
      %p78 = scmp.eq.s32.totalorder %s19, 1
      %p79 = por %p77, %p78
      %p80 = scmp.ne.s32.totalorder %s69, %s70
      %p81 = scmp.eq.s32.totalorder %s19, 0
      %p82 = por %p80, %p81
      %p83 = scmp.ne.s32.totalorder %s69, %s70
      %p84 = scmp.eq.s32.totalorder %s20, 1
      %p85 = por %p83, %p84
      %p87 = scmp.ne.s32.totalorder %s70, %s86
      %p88 = scmp.eq.s32.totalorder %s20, 0
      %p89 = por %p87, %p88
      %s90 = ssub.s32 %s14, %s21
      %p91 = scmp.eq.s32.totalorder %s90, 0
      %s93 = sadd.s32 %s92, 1
      %s94 = scalar_select %p91, %s92, %s93
      %p97 = pneg %p91
      %p98 = scmp.eq.s32.totalorder %s14, 1
      %p99 = por %p97, %p98
      %p100 = scmp.ne.s32.totalorder %s92, %s95
      %p101 = scmp.eq.s32.totalorder %s14, 0
      %p102 = por %p100, %p101
      %p103 = scmp.ne.s32.totalorder %s92, %s95
      %p104 = scmp.eq.s32.totalorder %s19, 1
      %p105 = por %p103, %p104
      %p106 = scmp.ne.s32.totalorder %s95, %s96
      %p107 = scmp.eq.s32.totalorder %s19, 0
      %p108 = por %p106, %p107
      %p109 = scmp.ne.s32.totalorder %s95, %s96
      %p110 = scmp.eq.s32.totalorder %s20, 1
      %p111 = por %p109, %p110
      %p113 = scmp.ne.s32.totalorder %s96, %s112
      %p114 = scmp.eq.s32.totalorder %s20, 0
      %p115 = por %p113, %p114
      %p116 = scmp.le.s32.totalorder 1, %s14
      %p117 = scmp.lt.s32.totalorder %s14, 3
      %p118 = pnand %p116, %p117
      %p119 = pneg %p118
      // Predicated region
      $region9: #{tpu_custom_call.1} parent=5 // pred_check
        _
      $region10: #{tpu_custom_call.1} parent=5 // pred_check_branch
        %121 = sbr.rel (%p118) target = $region12
      $region11: #{tpu_custom_call.1} parent=5 // pred_region
        %s122 = ssub.s32 %s14, 1
        // Predicated region
        $region13: #{tpu_custom_call.1} parent=11 // pred_check
          %p123 = pneg %p35
        $region14: #{tpu_custom_call.1} parent=11 // pred_check_branch
          %125 = sbr.rel (%p123) target = $region16
        $region15: #{tpu_custom_call.1} parent=11 // pred_region
          %s127 = ssub.s32 128, 128
          %128 = vsyncadd [#allocation3], %s127
          %s129 = sshll.u32 [#allocation2], 4
          %s130 = int_to_ptr.vmem [resolvable:$true] %s129
          %135 = dma.hbm_to_vmem [thread:$0]  %s0, 128, %s130, [#allocation3], 64, 64, 4
        $region16: #{tpu_custom_call.1} parent=11 // pred_fallthru
          _
        // Predicated region
        $region17: #{tpu_custom_call.1} parent=11 // pred_check
          %p136 = pneg %p56
        $region18: #{tpu_custom_call.1} parent=11 // pred_check_branch
          %138 = sbr.rel (%p136) target = $region20
        $region19: #{tpu_custom_call.1} parent=11 // pred_region
          %s140 = ssub.s32 1024, 1024
          %141 = vsyncadd [#allocation6], %s140
          %s142 = sshll.u32 [#allocation5], 4
          %s143 = int_to_ptr.vmem [resolvable:$true] %s142
          %148 = dma.hbm_to_vmem [thread:$0]  %s1, 1024, %s143, [#allocation6], 64, 64, 4
        $region20: #{tpu_custom_call.1} parent=11 // pred_fallthru
          _
      $region12: #{tpu_custom_call.1} parent=5 // pred_fallthru
        _
      %p149 = scmp.lt.s32.totalorder %s14, 2
      // Predicated region
      $region21: #{tpu_custom_call.1} parent=5 // pred_check
        %p150 = pneg %p149
      $region22: #{tpu_custom_call.1} parent=5 // pred_check_branch
        %152 = sbr.rel (%p150) target = $region24
      $region23: #{tpu_custom_call.1} parent=5 // pred_region
        // Predicated region
        $region25: #{tpu_custom_call.1} parent=23 // pred_check
          %p153 = pneg %p76
        $region26: #{tpu_custom_call.1} parent=23 // pred_check_branch
          %155 = sbr.rel (%p153) target = $region28
        $region27: #{tpu_custom_call.1} parent=23 // pred_region
          %s156 = sand.u32 %s14, 1
          %s157 = scalar_lea.sflag [#allocation3], %s156
          %s158 = sand.u32 %s66, 1
          %s159 = smul.addr %s158, 8
          %s160 = scalar_lea.vmem [#allocation7], %s159
          %s161 = smul.u32 2, %s14
          %s163 = ssub.s32 128, 128
          %164 = vsyncadd %s157, %s163
          %s165 = smul.addr %s161, 64
          %s166 = scalar_lea.hbm %s2, %s165
          %s167 = sshll.u32 %s160, 4
          %s168 = int_to_ptr.vmem [resolvable:$true] %s167
          %173 = dma.hbm_to_vmem [thread:$0]  %s166, 128, %s168, %s157, 64, 64, 4
        $region28: #{tpu_custom_call.1} parent=23 // pred_fallthru
          _
      $region24: #{tpu_custom_call.1} parent=5 // pred_fallthru
        _
      %p174 = scmp.le.s32.totalorder 1, %s14
      %p175 = scmp.lt.s32.totalorder %s14, 3
      %p176 = pnand %p174, %p175
      %p177 = pneg %p176
      // Predicated region
      $region29: #{tpu_custom_call.1} parent=5 // pred_check
        _
      $region30: #{tpu_custom_call.1} parent=5 // pred_check_branch
        %179 = sbr.rel (%p176) target = $region32
      $region31: #{tpu_custom_call.1} parent=5 // pred_region
        %s180 = ssub.s32 %s14, 1
        // Predicated region
        $region33: #{tpu_custom_call.1} parent=31 // pred_check
          %p181 = pneg %p35
        $region34: #{tpu_custom_call.1} parent=31 // pred_check_branch
          %183 = sbr.rel (%p181) target = $region36
        $region35: #{tpu_custom_call.1} parent=31 // pred_region
          %184 = dma.done [#allocation3], 128
        $region36: #{tpu_custom_call.1} parent=31 // pred_fallthru
          _
        // Predicated region
        $region37: #{tpu_custom_call.1} parent=31 // pred_check
          %p185 = pneg %p56
        $region38: #{tpu_custom_call.1} parent=31 // pred_check_branch
          %187 = sbr.rel (%p185) target = $region40
        $region39: #{tpu_custom_call.1} parent=31 // pred_region
          %188 = dma.done [#allocation6], 1024
        $region40: #{tpu_custom_call.1} parent=31 // pred_fallthru
          _
        %s189 = sand.u32 %s19, 1
        %s190 = scalar_lea.sflag [#allocation3], %s189
        %s191 = sand.u32 %s69, 1
        %s192 = smul.addr %s191, 8
        %s193 = scalar_lea.vmem [#allocation7], %s192
        // Predicated region
        $region41: #{tpu_custom_call.1} parent=31 // pred_check
          %p194 = pneg %p82
        $region42: #{tpu_custom_call.1} parent=31 // pred_check_branch
          %196 = sbr.rel (%p194) target = $region44
        $region43: #{tpu_custom_call.1} parent=31 // pred_region
          %197 = dma.done %s190, 128
        $region44: #{tpu_custom_call.1} parent=31 // pred_fallthru
          _
        %p198 = pneg %p35
        %p199 = pneg %p32
        %p200 = pneg %p56
        %p201 = pneg %p53
        %s202 = sand.u32 %s19, 1
        %s203 = scalar_lea.sflag [#allocation3], %s202
        %s204 = sand.u32 %s69, 1
        %s205 = smul.addr %s204, 8
        %s206 = scalar_lea.vmem [#allocation7], %s205
        %p207 = pneg %p82
        %p208 = pneg %p79
        %p209 = pneg %p108
        %p210 = pneg %p105
        %s211 = sand.u32 %s95, 1
        %s212 = scalar_lea.sflag [#allocation4], %s211
        %s213 = sand.u32 %s95, 1
        %s214 = smul.addr %s213, 16
        %s215 = scalar_lea.vmem [#allocation8], %s214
        %s216 = smul.u32 2, %s19
        %s217 = smul.u32 2, %s19
        %v219 = vld [vmem:[%s193] sm:$0xf]
        %v220 = vld [vmem:[%s193 + $0x4] sm:$0xf]
        %v221 = vld [vmem:[#allocation5] sm:$0xf]
        %v222 = vld [vmem:[#allocation5 + $0x4] sm:$0xf]
        %v223 = vld [vmem:[#allocation5 + $0x8] sm:$0xf]
        %v224 = vld [vmem:[#allocation5 + $0xc] sm:$0xf]
        %v225 = vld [vmem:[#allocation5 + $0x10] sm:$0xf]
        %v226 = vld [vmem:[#allocation5 + $0x14] sm:$0xf]
        %v227 = vld [vmem:[#allocation5 + $0x18] sm:$0xf]
        %v228 = vld [vmem:[#allocation5 + $0x1c] sm:$0xf]
        %v229 = vld [vmem:[#allocation5 + $0x20] sm:$0xf]
        %v230 = vld [vmem:[#allocation5 + $0x24] sm:$0xf]
        %v231 = vld [vmem:[#allocation5 + $0x28] sm:$0xf]
        %v232 = vld [vmem:[#allocation5 + $0x2c] sm:$0xf]
        %v233 = vld [vmem:[#allocation5 + $0x30] sm:$0xf]
        %v234 = vld [vmem:[#allocation5 + $0x34] sm:$0xf]
        %v235 = vld [vmem:[#allocation5 + $0x38] sm:$0xf]
        %v236 = vld [vmem:[#allocation5 + $0x3c] sm:$0xf]
        %v239 = vunpack.c.l.b16 %v219
        %v240 = vunpack.c.l.b16 %v220
        %v241 = vpack.c.b16 %v240, %v239
        %v259 = vunpack.c.l.b16 %v221
        %v260 = vunpack.c.l.b16 %v222
        %v261 = vunpack.c.l.b16 %v223
        %v262 = vunpack.c.l.b16 %v224
        %v263 = vunpack.c.l.b16 %v225
        %v264 = vunpack.c.l.b16 %v226
        %v265 = vunpack.c.l.b16 %v227
        %v266 = vunpack.c.l.b16 %v228
        %v267 = vunpack.c.l.b16 %v229
        %v268 = vunpack.c.l.b16 %v230
        %v269 = vunpack.c.l.b16 %v231
        %v270 = vunpack.c.l.b16 %v232
        %v271 = vunpack.c.l.b16 %v233
        %v272 = vunpack.c.l.b16 %v234
        %v273 = vunpack.c.l.b16 %v235
        %v274 = vunpack.c.l.b16 %v236
        %v275 = vpack.c.b16 %v260, %v259
        %v276 = vpack.c.b16 %v262, %v261
        %v277 = vpack.c.b16 %v264, %v263
        %v278 = vpack.c.b16 %v266, %v265
        %v279 = vpack.c.b16 %v268, %v267
        %v280 = vpack.c.b16 %v270, %v269
        %v281 = vpack.c.b16 %v272, %v271
        %v282 = vpack.c.b16 %v274, %v273
        %291 = vmatprep.subr.bf16.mxu0 0
        %292 = vmatpush1.bf16.msra.mxu0 %v275
        %293 = vmatprep.subr.bf16.mxu0 0
        %294 = vmatpush1.bf16.msra.mxu0 %v276
        %295 = vmatprep.subr.bf16.mxu0 0
        %296 = vmatpush1.bf16.msra.mxu0 %v277
        %297 = vmatprep.subr.bf16.mxu0 0
        %298 = vmatpush1.bf16.msra.mxu0 %v278
        %299 = vmatprep.subr.bf16.mxu0 0
        %300 = vmatpush1.bf16.msra.mxu0 %v279
        %301 = vmatprep.subr.bf16.mxu0 0
        %302 = vmatpush1.bf16.msra.mxu0 %v280
        %303 = vmatprep.subr.bf16.mxu0 0
        %304 = vmatpush1.bf16.msra.mxu0 %v281
        %305 = vmatprep.subr.bf16.mxu0 0
        %306 = vmatpush1.bf16.msra.mxu0 %v282
        %307 = vmatprep.subr.bf16.mxu0 0
        %308 = vmatpush1.bf16.msra.mxu0 0
        %309 = vmatprep.subr.bf16.mxu0 0
        %310 = vmatpush1.bf16.msra.mxu0 0
        %311 = vmatprep.subr.bf16.mxu0 0
        %312 = vmatpush1.bf16.msra.mxu0 0
        %313 = vmatprep.subr.bf16.mxu0 0
        %314 = vmatpush1.bf16.msra.mxu0 0
        %315 = vmatprep.subr.bf16.mxu0 0
        %316 = vmatpush1.bf16.msra.mxu0 0
        %317 = vmatprep.subr.bf16.mxu0 0
        %318 = vmatpush1.bf16.msra.mxu0 0
        %319 = vmatprep.subr.bf16.mxu0 0
        %320 = vmatpush1.bf16.msra.mxu0 0
        %321 = vmatprep.subr.bf16.mxu0 0
        %322 = vmatpush1.bf16.msra.mxu0 0
        %323 = vmatprep.mubr.bf16.mxu0 0
        %324 = vmatmul.mubr.bf16.gmra.mrb[0].mxu0 %v241
        %v325 = vpop.f32.mrb[0].mxu0
        %v326 = vadd.f32 0.0, %v325
        %v327 = vpop.f32.mrb[0].mxu0
        %v328 = vpop.f32.mrb[0].mxu0
        %v329 = vadd.f32 0.0, %v328
        %v330 = vpop.f32.mrb[0].mxu0
        %331 = vdwg.mxu0
        %v332 = vld [vmem:[#allocation2] sm:$0xf]
        %v333 = vld [vmem:[#allocation2 + $0x4] sm:$0xf]
        %v334 = vpack.c.bf16 %v329, %v326
        %v337 = vunpack.c.l.b16 %v332
        %v338 = vunpack.c.l.b16 %v333
        %v339 = vpack.c.b16 %v338, %v337
        %vm340 = vcmask 130048
        %v342 = vsel %vm340, %v339, 0
        %344 = vmatprep.subr.bf16.mxu0 0
        %345 = vmatpush1.bf16.msra.mxu0 %v334
        %346 = vmatprep.subr.bf16.mxu0 0
        %347 = vmatpush1.bf16.msra.mxu0 0
        %348 = vmatprep.subr.bf16.mxu0 0
        %349 = vmatpush1.bf16.msra.mxu0 0
        %350 = vmatprep.subr.bf16.mxu0 0
        %351 = vmatpush1.bf16.msra.mxu0 0
        %352 = vmatprep.subr.bf16.mxu0 0
        %353 = vmatpush1.bf16.msra.mxu0 0
        %354 = vmatprep.subr.bf16.mxu0 0
        %355 = vmatpush1.bf16.msra.mxu0 0
        %356 = vmatprep.subr.bf16.mxu0 0
        %357 = vmatpush1.bf16.msra.mxu0 0
        %358 = vmatprep.subr.bf16.mxu0 0
        %359 = vmatpush1.bf16.msra.mxu0 0
        %360 = vmatprep.subr.bf16.mxu0 0
        %361 = vmatpush1.bf16.msra.mxu0 0
        %362 = vmatprep.subr.bf16.mxu0 0
        %363 = vmatpush1.bf16.msra.mxu0 0
        %364 = vmatprep.subr.bf16.mxu0 0
        %365 = vmatpush1.bf16.msra.mxu0 0
        %366 = vmatprep.subr.bf16.mxu0 0
        %367 = vmatpush1.bf16.msra.mxu0 0
        %368 = vmatprep.subr.bf16.mxu0 0
        %369 = vmatpush1.bf16.msra.mxu0 0
        %370 = vmatprep.subr.bf16.mxu0 0
        %371 = vmatpush1.bf16.msra.mxu0 0
        %372 = vmatprep.subr.bf16.mxu0 0
        %373 = vmatpush1.bf16.msra.mxu0 0
        %374 = vmatprep.subr.bf16.mxu0 0
        %375 = vmatpush1.bf16.msra.mxu0 0
        %376 = vmatprep.mubr.bf16.mxu0 0
        %377 = vmatmul.mubr.bf16.gmra.mrb[0].mxu0 %v342
        %v378 = vpop.f32.mrb[0].mxu0
        %v379 = vadd.f32 0.0, %v378
        %v380 = vpop.f32.mrb[0].mxu0
        %v381 = vpop.f32.mrb[0].mxu0
        %v382 = vadd.f32 0.0, %v381
        %v383 = vpop.f32.mrb[0].mxu0
        %384 = vdwg.mxu0
        %385 = vst [vmem:[%s215] sm:$0xff] %v379
        %386 = vst [vmem:[%s215 + $0x8] sm:$0xff] %v382
        %s387 = sand.u32 %s95, 1
        %s388 = scalar_lea.sflag [#allocation4], %s387
        %s389 = sand.u32 %s95, 1
        %s390 = smul.addr %s389, 16
        %s391 = scalar_lea.vmem [#allocation8], %s390
        // Predicated region
        $region45: #{tpu_custom_call.1} parent=31 // pred_check
          %p392 = pneg %p105
        $region46: #{tpu_custom_call.1} parent=31 // pred_check_branch
          %394 = sbr.rel (%p392) target = $region48
        $region47: #{tpu_custom_call.1} parent=31 // pred_region
          %s395 = smul.u32 2, %s19
          %s397 = ssub.s32 256, 256
          %398 = vsyncadd %s388, %s397
          %s399 = smul.addr %s395, 128
          %s400 = scalar_lea.hbm %s3, %s399
          %s401 = sshll.u32 %s391, 4
          %s402 = int_to_ptr.vmem [resolvable:$true] %s401
          %407 = dma.vmem_to_hbm [thread:$0]  %s402, 256, %s400, %s388, 128, 128, 8
        $region48: #{tpu_custom_call.1} parent=31 // pred_fallthru
          _
      $region32: #{tpu_custom_call.1} parent=5 // pred_fallthru
        _
      %p408 = scmp.le.s32.totalorder 2, %s14
      // Predicated region
      $region49: #{tpu_custom_call.1} parent=5 // pred_check
        %p409 = pneg %p408
      $region50: #{tpu_custom_call.1} parent=5 // pred_check_branch
        %411 = sbr.rel (%p409) target = $region52
      $region51: #{tpu_custom_call.1} parent=5 // pred_region
        %s412 = ssub.s32 %s14, 2
        // Predicated region
        $region53: #{tpu_custom_call.1} parent=51 // pred_check
          %p413 = pneg %p111
        $region54: #{tpu_custom_call.1} parent=51 // pred_check_branch
          %415 = sbr.rel (%p413) target = $region56
        $region55: #{tpu_custom_call.1} parent=51 // pred_region
          %s416 = sand.u32 %s96, 1
          %s417 = scalar_lea.sflag [#allocation4], %s416
          %s418 = sand.u32 %s96, 1
          %s419 = smul.addr %s418, 16
          %s420 = scalar_lea.vmem [#allocation8], %s419
          %421 = dma.done %s417, 256
        $region56: #{tpu_custom_call.1} parent=51 // pred_fallthru
          _
      $region52: #{tpu_custom_call.1} parent=5 // pred_fallthru
        _
    $region6: #{tpu_custom_call.1} parent=1 // loop_footer
      %s18 = sadd.s32 1, %s14
    $region7: #{tpu_custom_call.1} parent=1 // loop_footer_branch
      %13 = sbr.rel target = $region3
    $region8: #{tpu_custom_call.1} parent=1 // loop_exit
      _
    %422 = vsyncpa [#allocation3], 1
    %s423 = scalar_lea.sflag [#allocation3], 1
    %424 = vsyncpa %s423, 1
    %425 = vsyncpa [#allocation6], 1
    %426 = vsyncpa [#allocation4], 1
    %s427 = scalar_lea.sflag [#allocation4], 1
    %428 = vsyncpa %s427, 1

</llo_original>
